<compile_context>
chip_gen: v5e
topology: v5e:2x2
jax: 0.10.0
libtpu: 0.0.40
codegen_flags: <defaults>
</compile_context>

<pallas_src>
import numpy as np
import jax
import jax.numpy as jnp
from jax import lax
from jax.experimental import pallas as pl
from jax.experimental.pallas import tpu as pltpu


def _round_up(x: int, m: int) -> int:
    return (x + m - 1) // m * m


# ----------------------------------------------------------------------------
# Diffusion schedule (gaussian_diffusion.get_named_beta_schedule('linear', 1000))
# ----------------------------------------------------------------------------
def linear_beta_schedule(num_timesteps: int = 1000) -> np.ndarray:
    scale = 1000.0 / num_timesteps
    beta_start = scale * 0.0001
    beta_end = scale * 0.02
    return np.linspace(beta_start, beta_end, num_timesteps, dtype=np.float64)


# ----------------------------------------------------------------------------
# Pallas kernel 1: fused q_sample
#   out = sqrt(acp[t]) * x + sqrt(1 - acp[t]) * noise
#   Per-batch scalar coefficients live in SMEM; data is retiled to
#   (B, rows, lane) so each grid step moves a sublane/lane-dense ~1 MiB block.
# ----------------------------------------------------------------------------
def _q_sample_kernel(a_ref, s_ref, x_ref, n_ref, o_ref):
    b = pl.program_id(0)            # batch index of this grid step
    a = a_ref[b]                    # scalar read from SMEM (broadcast is free)
    s = s_ref[b]
    o_ref[...] = a * x_ref[...] + s * n_ref[...]


def _choose_qsample_tiling(n: int):
    """Pick (padded_N, lane, rows, rows_per_block) for a flattened feature axis."""
    for lane in (1024, 512, 256, 128):
        if n % lane == 0:
            break
    else:
        lane = 128
    n_pad = _round_up(n, lane)
    rows = n_pad // lane
    # ~1 MiB f32 per block, rows-per-block a multiple of 8 (sublane-dense).
    rt_target = max(8, min(256, (1 << 20) // (lane * 4)))
    if rows <= rt_target:
        rt = rows                    # full extent -> always a legal block dim
    else:
        rt = rt_target
        rows = _round_up(rows, rt)
        n_pad = rows * lane
    return n_pad, lane, rows, rt


def q_sample_pallas(x, noise, sqrt_acp_t, sqrt_om_acp_t):
    B = x.shape[0]
    N = int(np.prod(x.shape[1:]))
    n_pad, lane, rows, rt = _choose_qsample_tiling(N)

    x2 = x.reshape(B, N).astype(jnp.float32)
    n2 = noise.reshape(B, N).astype(jnp.float32)
    if n_pad != N:
        pad = n_pad - N
        x2 = jnp.pad(x2, ((0, 0), (0, pad)))
        n2 = jnp.pad(n2, ((0, 0), (0, pad)))
    x3 = x2.reshape(B, rows, lane)
    n3 = n2.reshape(B, rows, lane)
    a = sqrt_acp_t.reshape(B).astype(jnp.float32)
    s = sqrt_om_acp_t.reshape(B).astype(jnp.float32)

    out = pl.pallas_call(
        _q_sample_kernel,
        out_shape=jax.ShapeDtypeStruct((B, rows, lane), jnp.float32),
        grid=(B, rows // rt),
        in_specs=[
            pl.BlockSpec(memory_space=pltpu.MemorySpace.SMEM),   # sqrt(acp[t])
            pl.BlockSpec(memory_space=pltpu.MemorySpace.SMEM),   # sqrt(1-acp[t])
            pl.BlockSpec((1, rt, lane), lambda b, r: (b, r, 0)),  # x
            pl.BlockSpec((1, rt, lane), lambda b, r: (b, r, 0)),  # noise
        ],
        out_specs=pl.BlockSpec((1, rt, lane), lambda b, r: (b, r, 0)),
        compiler_params=pltpu.CompilerParams(
            dimension_semantics=("parallel", "parallel")),
    )(a, s, x3, n3)

    out = out.reshape(B, n_pad)[:, :N]
    return out.reshape(x.shape)


# ----------------------------------------------------------------------------
# Pallas kernel 2: Res2Net stem (conv1 7x7/s2 -> bn1 -> relu) as im2col matmul
#   y = relu(patches_bf16 @ (W * bn_scale)_bf16 + bn_shift)   (f32 accumulate)
# ----------------------------------------------------------------------------
def _stem_kernel(p_ref, w_ref, shift_ref, o_ref):
    z = jnp.dot(p_ref[...], w_ref[...], preferred_element_type=jnp.float32)
    o_ref[...] = jnp.maximum(z + shift_ref[...], 0.0).astype(o_ref.dtype)


def res2net_stem_pallas(image_nchw, w_flat_scaled_bf16, bn_shift, *, tm=1024):
    """conv1(7x7, s2, p3) + bn1 + relu.

    Returns activations in NHWC layout (B, Ho, Wo, 64); the NCHW transpose is
    deliberately NOT performed here (it would cost a full HBM round trip and the
    downstream consumer is not part of this module).
    """
    B, Cin, H, W = image_nchw.shape
    # Convert the (cheap, 3-channel) image to NHWC once, then extract patches
    # already laid out as (B, Ho, Wo, Cin*kh*kw) so the 49x-inflated slab is
    # reshaped (no copy) rather than transposed.
    x_nhwc = jnp.transpose(image_nchw, (0, 2, 3, 1)).astype(jnp.bfloat16)
    patches = lax.conv_general_dilated_patches(
        x_nhwc,
        filter_shape=(7, 7),
        window_strides=(2, 2),
        padding=((3, 3), (3, 3)),
        dimension_numbers=("NHWC", "HWIO", "NHWC"),
    )  # (B, Ho, Wo, Cin*49); feature order is (Cin, kh, kw)-major (channel first)
    _, Ho, Wo, K = patches.shape
    M = B * Ho * Wo
    p2 = patches.reshape(M, K)

    Cout = w_flat_scaled_bf16.shape[1]
    tm_eff = min(tm, _round_up(M, 8))
    m_pad = _round_up(M, tm_eff)
    if m_pad != M:
        p2 = jnp.pad(p2, ((0, m_pad - M), (0, 0)))

    out = pl.pallas_call(
        _stem_kernel,
        out_shape=jax.ShapeDtypeStruct((m_pad, Cout), jnp.float32),
        grid=(m_pad // tm_eff,),
        in_specs=[
            pl.BlockSpec((tm_eff, K), lambda i: (i, 0)),   # im2col patches (bf16)
            pl.BlockSpec((K, Cout), lambda i: (0, 0)),     # BN-scaled weight (bf16), resident
            pl.BlockSpec((1, Cout), lambda i: (0, 0)),     # folded BN shift (f32), resident
        ],
        out_specs=pl.BlockSpec((tm_eff, Cout), lambda i: (i, 0)),
        compiler_params=pltpu.CompilerParams(
            dimension_semantics=("parallel",)),
    )(p2, w_flat_scaled_bf16, bn_shift)

    # TODO(synk): the materialized im2col still reads ~49x the image bytes from
    # HBM; a direct-conv kernel with manual DMA of overlapping row windows
    # (memory_space=pl.ANY + make_async_copy) would remove that expansion.
    return out[:M].reshape(B, Ho, Wo, Cout)


# ----------------------------------------------------------------------------
# Module wrapper (synthetic deterministic parameters; no checkpoint loading)
# ----------------------------------------------------------------------------
class DiffDualBranchPallas:
    def __init__(self, seed: int = 0):
        self.num_timesteps = 1000
        betas = linear_beta_schedule(self.num_timesteps)
        alphas = 1.0 - betas
        acp = np.cumprod(alphas, axis=0)
        self.sqrt_alphas_cumprod = jnp.asarray(np.sqrt(acp), dtype=jnp.float32)
        self.sqrt_one_minus_alphas_cumprod = jnp.asarray(
            np.sqrt(1.0 - acp), dtype=jnp.float32
        )

        # Res2Net stem parameters (conv1: 64x3x7x7, bn1: 64) -- deterministic init.
        k = jax.random.PRNGKey(seed)
        k_w, _ = jax.random.split(k)
        w = jax.random.normal(k_w, (64, 3, 7, 7), dtype=jnp.float32) * 0.05
        w_flat = w.reshape(64, 3 * 7 * 7).T  # (147, 64), (Cin,kh,kw)-major rows

        gamma = 1.0 + 0.01 * jnp.arange(64, dtype=jnp.float32)
        beta = 0.01 * jnp.arange(64, dtype=jnp.float32)
        rmean = 0.001 * jnp.arange(64, dtype=jnp.float32)
        rvar = jnp.ones((64,), dtype=jnp.float32)
        eps = 1e-5
        scale = gamma / jnp.sqrt(rvar + eps)
        shift = beta - rmean * scale

        # Fold BN scale into the conv weight (BN is affine along Cout); keep the
        # shift as the only per-channel add inside the kernel.
        self.conv1_w_scaled_bf16 = (w_flat * scale[None, :]).astype(jnp.bfloat16)
        self.bn1_shift = shift.reshape(1, 64).astype(jnp.float32)

        # f32 copies for the reference check.
        self._conv1_w_oihw = w
        self._bn1_scale = scale
        self._bn1_shift = shift

        # Dropout2d(0.2) is treated as identity (deterministic / eval semantics).

    # UniformSampler.sample(batch, device)
    def sampler_sample(self, batch_size, key):
        t = jax.random.randint(key, (batch_size,), 0, self.num_timesteps)
        weights = jnp.full((batch_size,), 1.0 / self.num_timesteps, jnp.float32)
        return t, weights

    def forward(self, image=None, x=None, pred_type=None, step=None,
                embedding=None, rng=None):
        if pred_type == "q_sample":
            rng = jax.random.PRNGKey(0) if rng is None else rng
            k_noise, k_t = jax.random.split(rng)
            noise = jax.random.normal(k_noise, x.shape, dtype=jnp.float32)
            t, _weight = self.sampler_sample(x.shape[0], k_t)
            a_t = self.sqrt_alphas_cumprod[t]
            s_t = self.sqrt_one_minus_alphas_cumprod[t]
            xt = q_sample_pallas(x, noise, a_t, s_t)
            return xt, t, noise

        elif pred_type == "denoise":
            # Res2Net stem (conv1 + bn1 + relu) on the MXU via Pallas (NHWC out).
            r0 = res2net_stem_pallas(
                image, self.conv1_w_scaled_bf16, self.bn1_shift
            )
            # TODO(synk): Res2Net layer1-3 / maxpool, PVT blocks, RDFM fusion and
            # Denoise_DualBranch are external modules whose definitions are not
            # provided in the reference source; not reproduced here.
            return r0

        elif pred_type == "ddim_sample":
            # TODO(synk): ddim_sample_loop requires the external Denoise_DualBranch
            # model; not reproducible from the given source.
            raise NotImplementedError("ddim_sample requires the external denoiser")

        else:
            raise ValueError(f"unknown pred_type: {pred_type}")


# ----------------------------------------------------------------------------
if __name__ == "__main__":
    model = DiffDualBranchPallas(seed=0)

    key = jax.random.PRNGKey(0)
    k_x, k_img, k_rng = jax.random.split(key, 3)

    # small shapes consistent with the module: x is the diffusion state (B,1,h,w),
    # image is the RGB conditioning image (B,3,H,W).
    x = jax.random.normal(k_x, (2, 1, 16, 16), dtype=jnp.float32)
    image = jax.random.normal(k_img, (2, 3, 32, 32), dtype=jnp.float32)

    # ---- q_sample branch (Pallas fused elementwise) -------------------------
    xt, t, noise = model.forward(x=x, pred_type="q_sample", rng=k_rng)
    xt = jax.block_until_ready(xt)

    a = model.sqrt_alphas_cumprod[t].reshape(-1, 1, 1, 1)
    s = model.sqrt_one_minus_alphas_cumprod[t].reshape(-1, 1, 1, 1)
    ref_q = a * x + s * noise
    np.testing.assert_allclose(np.asarray(xt), np.asarray(ref_q),
                               rtol=1e-5, atol=1e-5)

    # ---- denoise branch (Res2Net stem conv1+bn1+relu in Pallas) -------------
    r0 = model.forward(image=image, x=x, pred_type="denoise", step=t)
    r0 = jax.block_until_ready(r0)
    assert r0.shape == (2, 16, 16, 64)  # NHWC

    # reference: f32 conv + BN + ReLU via XLA, compared in NHWC (bf16 matmul tol)
    ref = lax.conv_general_dilated(
        image.astype(jnp.float32), model._conv1_w_oihw,
        window_strides=(2, 2), padding=((3, 3), (3, 3)),
        dimension_numbers=("NCHW", "OIHW", "NCHW"))
    ref = ref * model._bn1_scale.reshape(1, -1, 1, 1) \
              + model._bn1_shift.reshape(1, -1, 1, 1)
    ref = jnp.maximum(ref, 0.0)
    ref_nhwc = jnp.transpose(ref, (0, 2, 3, 1))
    np.testing.assert_allclose(np.asarray(r0), np.asarray(ref_nhwc),
                               rtol=5e-2, atol=5e-2)

    print("KERNEL_OK")
</pallas_src>

<mosaic_0001>
module attributes {stable_mosaic.version = 11 : i64} {
  func.func @_q_sample_kernel(%arg0: i32, %arg1: i32, %arg2: memref<2xf32, #tpu.memory_space<smem>>, %arg3: memref<2xf32, #tpu.memory_space<smem>>, %arg4: memref<1x1x256xf32, #tpu.memory_space<vmem>>, %arg5: memref<1x1x256xf32, #tpu.memory_space<vmem>>, %arg6: memref<1x1x256xf32, #tpu.memory_space<vmem>>) attributes {dimension_semantics = [#tpu.dimension_semantics<parallel>, #tpu.dimension_semantics<parallel>], iteration_bounds = array<i64: 2, 1>, scalar_prefetch = 0 : i64, scratch_operands = 0 : i64, tpu.core_type = #tpu.core_type<tc>, window_params = [{transform_indices = @transform_0, window_bounds = array<i64: 2>}, {transform_indices = @transform_1, window_bounds = array<i64: 2>}, {transform_indices = @transform_2, window_bounds = array<i64: 1, 1, 256>}, {transform_indices = @transform_3, window_bounds = array<i64: 1, 1, 256>}, {transform_indices = @transform_4, window_bounds = array<i64: 1, 1, 256>}]} {
    %0 = arith.index_cast %arg0 : i32 to index
    %1 = memref.load %arg2[%0] : memref<2xf32, #tpu.memory_space<smem>>
    %2 = arith.index_cast %arg0 : i32 to index
    %3 = memref.load %arg3[%2] : memref<2xf32, #tpu.memory_space<smem>>
    %c0 = arith.constant 0 : index
    %c0_0 = arith.constant 0 : index
    %c0_1 = arith.constant 0 : index
    %4 = vector.load %arg4[%c0, %c0_0, %c0_1] : memref<1x1x256xf32, #tpu.memory_space<vmem>>, vector<1x1x256xf32>
    %5 = vector.broadcast %1 : f32 to vector<1x1x256xf32>
    %6 = arith.mulf %5, %4 : vector<1x1x256xf32>
    %c0_2 = arith.constant 0 : index
    %c0_3 = arith.constant 0 : index
    %c0_4 = arith.constant 0 : index
    %7 = vector.load %arg5[%c0_2, %c0_3, %c0_4] : memref<1x1x256xf32, #tpu.memory_space<vmem>>, vector<1x1x256xf32>
    %8 = vector.broadcast %3 : f32 to vector<1x1x256xf32>
    %9 = arith.mulf %8, %7 : vector<1x1x256xf32>
    %10 = arith.addf %6, %9 : vector<1x1x256xf32>
    %c0_5 = arith.constant 0 : index
    %c0_6 = arith.constant 0 : index
    %c0_7 = arith.constant 0 : index
    %11 = vector.load %arg6[%c0_5, %c0_6, %c0_7] : memref<1x1x256xf32, #tpu.memory_space<vmem>>, vector<1x1x256xf32>
    tpu.vector_store %arg6[%c0_5, %c0_6, %c0_7], %10 {strides = array<i32>} : memref<1x1x256xf32, #tpu.memory_space<vmem>>, vector<1x1x256xf32>,
    return
  }
  func.func @transform_0(%arg0: i32, %arg1: i32) -> i32 {
    %c0_i32 = arith.constant 0 : i32
    %c0_i32_0 = arith.constant 0 : i32
    return %c0_i32 : i32
  }
  func.func @transform_1(%arg0: i32, %arg1: i32) -> i32 {
    %c0_i32 = arith.constant 0 : i32
    %c0_i32_0 = arith.constant 0 : i32
    return %c0_i32 : i32
  }
  func.func @transform_2(%arg0: i32, %arg1: i32) -> (i32, i32, i32) {
    %c0_i32 = arith.constant 0 : i32
    %c0_i32_0 = arith.constant 0 : i32
    return %arg0, %arg1, %c0_i32 : i32, i32, i32
  }
  func.func @transform_3(%arg0: i32, %arg1: i32) -> (i32, i32, i32) {
    %c0_i32 = arith.constant 0 : i32
    %c0_i32_0 = arith.constant 0 : i32
    return %arg0, %arg1, %c0_i32 : i32, i32, i32
  }
  func.func @transform_4(%arg0: i32, %arg1: i32) -> (i32, i32, i32) {
    %c0_i32 = arith.constant 0 : i32
    %c0_i32_0 = arith.constant 0 : i32
    return %arg0, %arg1, %c0_i32 : i32, i32, i32
  }
}

</mosaic_0001>

<llo_original>
// kernel: tpu_custom_call.1
$region0: #{tpu_custom_call.1}
  #allocation0 [shape = 'u32[]', space=smem, size = 0x4, offset = 0x4, fixed_abs, tag = 'smem constant byte address 0x4 - core index']
  #allocation1 [shape = 'u32[72,128]{1,0:T(1,128)}', space=vmem, size = 0x9000, scoped, tag = 'internal scratch']
  %s0 = inlined_call_operand.hbm [shape: f32[2], index: 0, kind: input, shape index: {}]
  %s1 = inlined_call_operand.hbm [shape: f32[2], index: 1, kind: input, shape index: {}]
  %s2 = inlined_call_operand.hbm [shape: f32[2,1,256], index: 2, kind: input, shape index: {}]
  %s3 = inlined_call_operand.hbm [shape: f32[2,1,256], index: 3, kind: input, shape index: {}]
  %s4 = inlined_call_operand.hbm [shape: f32[2,1,256], index: 4, kind: output, shape index: {}]
  %s5 = sld [smem:[#allocation0]]
  $region65: #{tpu_custom_call.1} parent=0
    _
  %s7 = ssub.s32 1, %s5
  %s8 = scalar_select 0, %s7, %s5
  $region1: #{tpu_custom_call.1} parent=0
    #allocation2 [shape = 'u8[512]{0}', space=smem, size = 0x200, scoped, tag = 'input window, operand 0, single buffered']
    #allocation3 [shape = 's32[2]{0}', space=sflag, size = 0x8, scoped, tag = 'scoped memory for tpu_custom_call.1']
    #allocation4 [shape = 's32[2]{0}', space=sflag, size = 0x8, scoped, tag = 'scoped memory for tpu_custom_call.1']
    #allocation5 [shape = 's32[2]{0}', space=sflag, size = 0x8, scoped, tag = 'scoped memory for tpu_custom_call.1']
    #allocation6 [shape = 'u8[512]{0}', space=smem, size = 0x200, scoped, tag = 'input window, operand 1, single buffered']
    #allocation7 [shape = 's32[1]{0}', space=sflag, size = 0x4, scoped, tag = 'scoped memory for tpu_custom_call.1']
    #allocation8 [shape = 'u8[2048]{0}', space=vmem, size = 0x800, scoped, tag = 'input window, operand 2']
    #allocation9 [shape = 'u8[2048]{0}', space=vmem, size = 0x800, scoped, tag = 'input window, operand 3']
    #allocation10 [shape = 's32[2]{0}', space=sflag, size = 0x8, scoped, tag = 'scoped memory for tpu_custom_call.1']
    #allocation11 [shape = 'u8[2048]{0}', space=vmem, size = 0x800, scoped, tag = 'output window, operand 0']
    %9 = vsyncpa [#allocation5], 0
    %10 = vsyncpa [#allocation7], 0
    %11 = vsyncpa [#allocation3], 0
    %s12 = scalar_lea.sflag [#allocation3], 1
    %13 = vsyncpa %s12, 0
    %14 = vsyncpa [#allocation10], 0
    %s15 = scalar_lea.sflag [#allocation10], 1
    %16 = vsyncpa %s15, 0
    %17 = vsyncpa [#allocation4], 0
    %s18 = scalar_lea.sflag [#allocation4], 1
    %19 = vsyncpa %s18, 0
    loop: start=0, step=1, limit=4
    $region2: #{tpu_custom_call.1} parent=1 // loop_pre_header
      _
    $region3: #{tpu_custom_call.1} parent=1 // loop_header
      %s21 = sphi 0, %s25
      %p22 = scmp.ge.s32.totalorder %s21, 4
      %s28 = sphi 0, %s40
      %s29 = sphi 0, %s36
      %s30 = sphi 0, %s28
      %s31 = sphi 0, %s29
      %s32 = sphi 0, %s30
      %s33 = sphi 0, %s31
      %s41 = sphi 0, %s41
      %s43 = sphi 0, %s41
      %s44 = sphi 0, %s43
      %s58 = sphi 0, %s44
      %s62 = sphi 0, %s62
      %s64 = sphi 0, %s62
      %s65 = sphi 0, %s64
      %s79 = sphi 0, %s65
      %s87 = sphi 0, %s89
      %s90 = sphi 0, %s87
      %s91 = sphi 0, %s90
      %s107 = sphi 0, %s91
      %s115 = sphi 0, %s117
      %s118 = sphi 0, %s115
      %s119 = sphi 0, %s118
      %s135 = sphi 0, %s119
      %s143 = sphi 0, %s145
      %s146 = sphi 0, %s143
      %s147 = sphi 0, %s146
      %s163 = sphi 0, %s147
    $region4: #{tpu_custom_call.1} parent=1 // loop_header_branch
      %24 = sbr.rel (%p22) target = $region8
    $region5: #{tpu_custom_call.1} parent=1 // loop_body
      %s26 = ssub.s32 %s21, 1
      %s27 = ssub.s32 %s21, 2
      %s34 = sadd.s32 1, %s29
      %p35 = scmp.ge.s32.totalorder %s34, 1
      %s36 = scalar_select %p35, 0, %s34
      %s37 = sadd.s32 1, %s28
      %s38 = scalar_select %p35, %s37, %s28
      %p39 = scmp.ge.s32.totalorder %s38, 2
      %s40 = scalar_select %p39, 0, %s38
      %s42 = sadd.s32 %s41, 1
      %p45 = scmp.eq.s32.totalorder %s21, 1
      %p46 = scmp.ne.s32.totalorder %s41, %s43
      %p47 = scmp.eq.s32.totalorder %s21, 0
      %p48 = por %p46, %p47
      %p49 = scmp.ne.s32.totalorder %s41, %s43
      %p50 = scmp.eq.s32.totalorder %s26, 1
      %p51 = por %p49, %p50
      %p52 = scmp.ne.s32.totalorder %s43, %s44
      %p53 = scmp.eq.s32.totalorder %s26, 0
      %p54 = por %p52, %p53
      %p55 = scmp.ne.s32.totalorder %s43, %s44
      %p56 = scmp.eq.s32.totalorder %s27, 1
      %p57 = por %p55, %p56
      %p59 = scmp.ne.s32.totalorder %s44, %s58
      %p60 = scmp.eq.s32.totalorder %s27, 0
      %p61 = por %p59, %p60
      %s63 = sadd.s32 %s62, 1
      %p66 = scmp.eq.s32.totalorder %s21, 1
      %p67 = scmp.ne.s32.totalorder %s62, %s64
      %p68 = scmp.eq.s32.totalorder %s21, 0
      %p69 = por %p67, %p68
      %p70 = scmp.ne.s32.totalorder %s62, %s64
      %p71 = scmp.eq.s32.totalorder %s26, 1
      %p72 = por %p70, %p71
      %p73 = scmp.ne.s32.totalorder %s64, %s65
      %p74 = scmp.eq.s32.totalorder %s26, 0
      %p75 = por %p73, %p74
      %p76 = scmp.ne.s32.totalorder %s64, %s65
      %p77 = scmp.eq.s32.totalorder %s27, 1
      %p78 = por %p76, %p77
      %p80 = scmp.ne.s32.totalorder %s65, %s79
      %p81 = scmp.eq.s32.totalorder %s27, 0
      %p82 = por %p80, %p81
      %s83 = ssub.s32 %s28, %s40
      %s84 = ssub.s32 %s29, %s36
      %s85 = sor.u32 %s83, %s84
      %p86 = scmp.eq.s32.totalorder %s85, 0
      %s88 = sadd.s32 %s87, 1
      %s89 = scalar_select %p86, %s87, %s88
      %p92 = pneg %p86
      %p93 = scmp.eq.s32.totalorder %s21, 1
      %p94 = por %p92, %p93
      %p95 = scmp.ne.s32.totalorder %s87, %s90
      %p96 = scmp.eq.s32.totalorder %s21, 0
      %p97 = por %p95, %p96
      %p98 = scmp.ne.s32.totalorder %s87, %s90
      %p99 = scmp.eq.s32.totalorder %s26, 1
      %p100 = por %p98, %p99
      %p101 = scmp.ne.s32.totalorder %s90, %s91
      %p102 = scmp.eq.s32.totalorder %s26, 0
      %p103 = por %p101, %p102
      %p104 = scmp.ne.s32.totalorder %s90, %s91
      %p105 = scmp.eq.s32.totalorder %s27, 1
      %p106 = por %p104, %p105
      %p108 = scmp.ne.s32.totalorder %s91, %s107
      %p109 = scmp.eq.s32.totalorder %s27, 0
      %p110 = por %p108, %p109
      %s111 = ssub.s32 %s28, %s40
      %s112 = ssub.s32 %s29, %s36
      %s113 = sor.u32 %s111, %s112
      %p114 = scmp.eq.s32.totalorder %s113, 0
      %s116 = sadd.s32 %s115, 1
      %s117 = scalar_select %p114, %s115, %s116
      %p120 = pneg %p114
      %p121 = scmp.eq.s32.totalorder %s21, 1
      %p122 = por %p120, %p121
      %p123 = scmp.ne.s32.totalorder %s115, %s118
      %p124 = scmp.eq.s32.totalorder %s21, 0
      %p125 = por %p123, %p124
      %p126 = scmp.ne.s32.totalorder %s115, %s118
      %p127 = scmp.eq.s32.totalorder %s26, 1
      %p128 = por %p126, %p127
      %p129 = scmp.ne.s32.totalorder %s118, %s119
      %p130 = scmp.eq.s32.totalorder %s26, 0
      %p131 = por %p129, %p130
      %p132 = scmp.ne.s32.totalorder %s118, %s119
      %p133 = scmp.eq.s32.totalorder %s27, 1
      %p134 = por %p132, %p133
      %p136 = scmp.ne.s32.totalorder %s119, %s135
      %p137 = scmp.eq.s32.totalorder %s27, 0
      %p138 = por %p136, %p137
      %s139 = ssub.s32 %s28, %s40
      %s140 = ssub.s32 %s29, %s36
      %s141 = sor.u32 %s139, %s140
      %p142 = scmp.eq.s32.totalorder %s141, 0
      %s144 = sadd.s32 %s143, 1
      %s145 = scalar_select %p142, %s143, %s144
      %p148 = pneg %p142
      %p149 = scmp.eq.s32.totalorder %s21, 1
      %p150 = por %p148, %p149
      %p151 = scmp.ne.s32.totalorder %s143, %s146
      %p152 = scmp.eq.s32.totalorder %s21, 0
      %p153 = por %p151, %p152
      %p154 = scmp.ne.s32.totalorder %s143, %s146
      %p155 = scmp.eq.s32.totalorder %s26, 1
      %p156 = por %p154, %p155
      %p157 = scmp.ne.s32.totalorder %s146, %s147
      %p158 = scmp.eq.s32.totalorder %s26, 0
      %p159 = por %p157, %p158
      %p160 = scmp.ne.s32.totalorder %s146, %s147
      %p161 = scmp.eq.s32.totalorder %s27, 1
      %p162 = por %p160, %p161
      %p164 = scmp.ne.s32.totalorder %s147, %s163
      %p165 = scmp.eq.s32.totalorder %s27, 0
      %p166 = por %p164, %p165
      %p167 = scmp.le.s32.totalorder 1, %s21
      %p168 = scmp.lt.s32.totalorder %s21, 3
      %p169 = pnand %p167, %p168
      %p170 = pneg %p169
      // Predicated region
      $region9: #{tpu_custom_call.1} parent=5 // pred_check
        _
      $region10: #{tpu_custom_call.1} parent=5 // pred_check_branch
        %172 = sbr.rel (%p169) target = $region12
      $region11: #{tpu_custom_call.1} parent=5 // pred_region
        %s173 = ssub.s32 %s21, 1
        // Predicated region
        $region13: #{tpu_custom_call.1} parent=11 // pred_check
          %p174 = pneg %p54
        $region14: #{tpu_custom_call.1} parent=11 // pred_check_branch
          %176 = sbr.rel (%p174) target = $region16
        $region15: #{tpu_custom_call.1} parent=11 // pred_region
          %178 = vsyncadd [#allocation5], 0
          %s180 = sshll.u32 %s0, 4
          %s181 = int_to_ptr.hbm [resolvable:$true] %s180
          %183 = dma.hbm_to_smem %s181, 16, [#allocation2], [#allocation5]
        $region16: #{tpu_custom_call.1} parent=11 // pred_fallthru
          _
        // Predicated region
        $region17: #{tpu_custom_call.1} parent=11 // pred_check
          %p184 = pneg %p75
        $region18: #{tpu_custom_call.1} parent=11 // pred_check_branch
          %186 = sbr.rel (%p184) target = $region20
        $region19: #{tpu_custom_call.1} parent=11 // pred_region
          %188 = vsyncadd [#allocation7], 0
          %s190 = sshll.u32 %s1, 4
          %s191 = int_to_ptr.hbm [resolvable:$true] %s190
          %193 = dma.hbm_to_smem %s191, 16, [#allocation6], [#allocation7]
        $region20: #{tpu_custom_call.1} parent=11 // pred_fallthru
          _
      $region12: #{tpu_custom_call.1} parent=5 // pred_fallthru
        _
      %p194 = scmp.lt.s32.totalorder %s21, 2
      // Predicated region
      $region21: #{tpu_custom_call.1} parent=5 // pred_check
        %p195 = pneg %p194
      $region22: #{tpu_custom_call.1} parent=5 // pred_check_branch
        %197 = sbr.rel (%p195) target = $region24
      $region23: #{tpu_custom_call.1} parent=5 // pred_region
        // Predicated region
        $region25: #{tpu_custom_call.1} parent=23 // pred_check
          %p198 = pneg %p97
        $region26: #{tpu_custom_call.1} parent=23 // pred_check_branch
          %200 = sbr.rel (%p198) target = $region28
        $region27: #{tpu_custom_call.1} parent=23 // pred_region
          %s201 = sand.u32 %s87, 1
          %s202 = scalar_lea.sflag [#allocation3], %s201
          %s203 = sand.u32 %s87, 1
          %s204 = smul.addr %s203, 2
          %s205 = scalar_lea.vmem [#allocation8], %s204
          %207 = vsyncadd %s202, 0
          %s208 = smul.addr %s29, 2
          %s209 = smul.addr %s28, 2
          %s210 = sadd.s32 %s208, %s209
          %s211 = scalar_lea.hbm %s2, %s210
          %s213 = sshll.u32 %s211, 4
          %s214 = int_to_ptr.hbm [resolvable:$true] %s213
          %s215 = sshll.u32 %s205, 4
          %s216 = int_to_ptr.vmem [resolvable:$true] %s215
          %218 = dma.hbm_to_vmem [thread:$0]  %s214, 32, %s216, %s202
        $region28: #{tpu_custom_call.1} parent=23 // pred_fallthru
          _
        // Predicated region
        $region29: #{tpu_custom_call.1} parent=23 // pred_check
          %p219 = pneg %p125
        $region30: #{tpu_custom_call.1} parent=23 // pred_check_branch
          %221 = sbr.rel (%p219) target = $region32
        $region31: #{tpu_custom_call.1} parent=23 // pred_region
          %s222 = sand.u32 %s115, 1
          %s223 = scalar_lea.sflag [#allocation10], %s222
          %s224 = sand.u32 %s115, 1
          %s225 = smul.addr %s224, 2
          %s226 = scalar_lea.vmem [#allocation9], %s225
          %228 = vsyncadd %s223, 0
          %s229 = smul.addr %s29, 2
          %s230 = smul.addr %s28, 2
          %s231 = sadd.s32 %s229, %s230
          %s232 = scalar_lea.hbm %s3, %s231
          %s234 = sshll.u32 %s232, 4
          %s235 = int_to_ptr.hbm [resolvable:$true] %s234
          %s236 = sshll.u32 %s226, 4
          %s237 = int_to_ptr.vmem [resolvable:$true] %s236
          %239 = dma.hbm_to_vmem [thread:$0]  %s235, 32, %s237, %s223
        $region32: #{tpu_custom_call.1} parent=23 // pred_fallthru
          _
      $region24: #{tpu_custom_call.1} parent=5 // pred_fallthru
        _
      %p240 = scmp.le.s32.totalorder 1, %s21
      %p241 = scmp.lt.s32.totalorder %s21, 3
      %p242 = pnand %p240, %p241
      %p243 = pneg %p242
      // Predicated region
      $region33: #{tpu_custom_call.1} parent=5 // pred_check
        _
      $region34: #{tpu_custom_call.1} parent=5 // pred_check_branch
        %245 = sbr.rel (%p242) target = $region36
      $region35: #{tpu_custom_call.1} parent=5 // pred_region
        %s246 = ssub.s32 %s21, 1
        // Predicated region
        $region37: #{tpu_custom_call.1} parent=35 // pred_check
          %p247 = pneg %p54
        $region38: #{tpu_custom_call.1} parent=35 // pred_check_branch
          %249 = sbr.rel (%p247) target = $region40
        $region39: #{tpu_custom_call.1} parent=35 // pred_region
          %251 = dma.done [#allocation5], 16
        $region40: #{tpu_custom_call.1} parent=35 // pred_fallthru
          _
        // Predicated region
        $region41: #{tpu_custom_call.1} parent=35 // pred_check
          %p252 = pneg %p75
        $region42: #{tpu_custom_call.1} parent=35 // pred_check_branch
          %254 = sbr.rel (%p252) target = $region44
        $region43: #{tpu_custom_call.1} parent=35 // pred_region
          %256 = dma.done [#allocation7], 16
        $region44: #{tpu_custom_call.1} parent=35 // pred_fallthru
          _
        %s257 = sand.u32 %s90, 1
        %s258 = scalar_lea.sflag [#allocation3], %s257
        %s259 = sand.u32 %s90, 1
        %s260 = smul.addr %s259, 2
        %s261 = scalar_lea.vmem [#allocation8], %s260
        // Predicated region
        $region45: #{tpu_custom_call.1} parent=35 // pred_check
          %p262 = pneg %p103
        $region46: #{tpu_custom_call.1} parent=35 // pred_check_branch
          %264 = sbr.rel (%p262) target = $region48
        $region47: #{tpu_custom_call.1} parent=35 // pred_region
          %266 = dma.done %s258, 32
        $region48: #{tpu_custom_call.1} parent=35 // pred_fallthru
          _
        %s267 = sand.u32 %s118, 1
        %s268 = scalar_lea.sflag [#allocation10], %s267
        %s269 = sand.u32 %s118, 1
        %s270 = smul.addr %s269, 2
        %s271 = scalar_lea.vmem [#allocation9], %s270
        // Predicated region
        $region49: #{tpu_custom_call.1} parent=35 // pred_check
          %p272 = pneg %p131
        $region50: #{tpu_custom_call.1} parent=35 // pred_check_branch
          %274 = sbr.rel (%p272) target = $region52
        $region51: #{tpu_custom_call.1} parent=35 // pred_region
          %276 = dma.done %s268, 32
        $region52: #{tpu_custom_call.1} parent=35 // pred_fallthru
          _
        %277 = sfence
        %p278 = pneg %p54
        %p279 = pneg %p51
        %p280 = pneg %p75
        %p281 = pneg %p72
        %s282 = sand.u32 %s90, 1
        %s283 = scalar_lea.sflag [#allocation3], %s282
        %s284 = sand.u32 %s90, 1
        %s285 = smul.addr %s284, 2
        %s286 = scalar_lea.vmem [#allocation8], %s285
        %p287 = pneg %p103
        %p288 = pneg %p100
        %s289 = sand.u32 %s118, 1
        %s290 = scalar_lea.sflag [#allocation10], %s289
        %s291 = sand.u32 %s118, 1
        %s292 = smul.addr %s291, 2
        %s293 = scalar_lea.vmem [#allocation9], %s292
        %p294 = pneg %p131
        %p295 = pneg %p128
        %p296 = pneg %p159
        %p297 = pneg %p156
        %s298 = sand.u32 %s146, 1
        %s299 = scalar_lea.sflag [#allocation4], %s298
        %s300 = sand.u32 %s146, 1
        %s301 = smul.addr %s300, 2
        %s302 = scalar_lea.vmem [#allocation11], %s301
        %s303 = sld [smem:[#allocation2 + %s30]]
        %s304 = sld [smem:[#allocation6 + %s30]]
        %v305 = vld [vmem:[%s261] sm:$0x3]
        %v306 = vstv %s303
        %v307 = vmul.f32 %v306, %v305
        %v308 = vld [vmem:[%s271] sm:$0x3]
        %v309 = vstv %s304
        %v310 = vmul.f32 %v309, %v308
        %v311 = vadd.f32 %v307, %v310
        %v312 = vlaneseq
        %vm313 = vcmp.ge.s32.totalorder %v312, 0
        %vm314 = vcmp.lt.s32.totalorder %v312, 256
        %vm315 = vmand %vm313, %vm314
        %316 = vst.msk [vmem:[%s302] sm:$0x3] %vm315, %v311
        %s317 = sand.u32 %s146, 1
        %s318 = scalar_lea.sflag [#allocation4], %s317
        %s319 = sand.u32 %s146, 1
        %s320 = smul.addr %s319, 2
        %s321 = scalar_lea.vmem [#allocation11], %s320
        // Predicated region
        $region53: #{tpu_custom_call.1} parent=35 // pred_check
          %p322 = pneg %p156
        $region54: #{tpu_custom_call.1} parent=35 // pred_check_branch
          %324 = sbr.rel (%p322) target = $region56
        $region55: #{tpu_custom_call.1} parent=35 // pred_region
          %326 = vsyncadd %s318, 0
          %s327 = smul.addr %s31, 2
          %s328 = smul.addr %s30, 2
          %s329 = sadd.s32 %s327, %s328
          %s330 = scalar_lea.hbm %s4, %s329
          %s332 = sshll.u32 %s321, 4
          %s333 = int_to_ptr.vmem [resolvable:$true] %s332
          %s334 = sshll.u32 %s330, 4
          %s335 = int_to_ptr.hbm [resolvable:$true] %s334
          %337 = dma.vmem_to_hbm [thread:$0]  %s333, 32, %s335, %s318
        $region56: #{tpu_custom_call.1} parent=35 // pred_fallthru
          _
      $region36: #{tpu_custom_call.1} parent=5 // pred_fallthru
        _
      %p338 = scmp.le.s32.totalorder 2, %s21
      // Predicated region
      $region57: #{tpu_custom_call.1} parent=5 // pred_check
        %p339 = pneg %p338
      $region58: #{tpu_custom_call.1} parent=5 // pred_check_branch
        %341 = sbr.rel (%p339) target = $region60
      $region59: #{tpu_custom_call.1} parent=5 // pred_region
        %s342 = ssub.s32 %s21, 2
        // Predicated region
        $region61: #{tpu_custom_call.1} parent=59 // pred_check
          %p343 = pneg %p162
        $region62: #{tpu_custom_call.1} parent=59 // pred_check_branch
          %345 = sbr.rel (%p343) target = $region64
        $region63: #{tpu_custom_call.1} parent=59 // pred_region
          %s346 = sand.u32 %s147, 1
          %s347 = scalar_lea.sflag [#allocation4], %s346
          %s348 = sand.u32 %s147, 1
          %s349 = smul.addr %s348, 2
          %s350 = scalar_lea.vmem [#allocation11], %s349
          %352 = dma.done %s347, 32
        $region64: #{tpu_custom_call.1} parent=59 // pred_fallthru
          _
      $region60: #{tpu_custom_call.1} parent=5 // pred_fallthru
        _
    $region6: #{tpu_custom_call.1} parent=1 // loop_footer
      %s25 = sadd.s32 1, %s21
    $region7: #{tpu_custom_call.1} parent=1 // loop_footer_branch
      %20 = sbr.rel target = $region3
    $region8: #{tpu_custom_call.1} parent=1 // loop_exit
      _
    %353 = vsyncpa [#allocation3], 1
    %s354 = scalar_lea.sflag [#allocation3], 1
    %355 = vsyncpa %s354, 1
    %356 = vsyncpa [#allocation10], 1
    %s357 = scalar_lea.sflag [#allocation10], 1
    %358 = vsyncpa %s357, 1
    %359 = vsyncpa [#allocation4], 1
    %s360 = scalar_lea.sflag [#allocation4], 1
    %361 = vsyncpa %s360, 1
    %362 = vsyncpa [#allocation5], 1
    %s363 = scalar_lea.sflag [#allocation5], 1
    %364 = vsyncpa %s363, 1
    %365 = vsyncpa [#allocation7], 1

</llo_original>
